<compile_context>
chip_gen: v6e
topology: v6e:2x2x1
jax: 0.10.0
libtpu: 0.0.40
codegen_flags: <defaults>
</compile_context>

<pallas_src>
import math

import jax
import jax.numpy as jnp
from jax.experimental import pallas as pl
from jax.experimental.pallas import tpu as pltpu


def _round_up(x, m):
    return ((x + m - 1) // m) * m


def _masked_dense_kernel(x_ref, w_ref, wm_ref, b_ref, bm_ref, o_ref, acc_ref):
    """Tiled masked matmul: mask applied per K-tile, bias in finalize."""
    k = pl.program_id(2)

    @pl.when(k == 0)
    def _():
        acc_ref[...] = jnp.zeros_like(acc_ref)

    w = w_ref[...] * wm_ref[...]                      # VPU, hidden under MXU
    acc_ref[...] += jnp.dot(x_ref[...], w, preferred_element_type=jnp.float32)

    @pl.when(k == pl.num_programs(2) - 1)
    def _():
        bias = b_ref[...] * bm_ref[...]               # (1, tn), only once per (i, j)
        o_ref[...] = (acc_ref[...] + bias).astype(o_ref.dtype)


def _premasked_dense_kernel(x_ref, w_ref, b_ref, o_ref, acc_ref):
    """Same pipeline, but w / b already masked in the wrapper (half the HBM bytes)."""
    k = pl.program_id(2)

    @pl.when(k == 0)
    def _():
        acc_ref[...] = jnp.zeros_like(acc_ref)

    acc_ref[...] += jnp.dot(x_ref[...], w_ref[...],
                            preferred_element_type=jnp.float32)

    @pl.when(k == pl.num_programs(2) - 1)
    def _():
        o_ref[...] = (acc_ref[...] + b_ref[...]).astype(o_ref.dtype)


def masked_dense(inputs, w, w_mask, b, b_mask, *, premask=False,
                 tm=None, tn=None, tk=None):
    """MaskedDense forward as a tiled Pallas TPU kernel.

    inputs : (B, in_features) float32
    w, w_mask : (in_features, out_features) float32
    b, b_mask : (out_features,) float32
    premask : if True, fold the (static) masks into w/b in the wrapper and
              stream only the pre-masked weight (halves HBM weight traffic).
    returns : (B, out_features) float32
    """
    B, K = inputs.shape
    K2, N = w.shape
    assert K2 == K, "weight/in_features mismatch"
    dtype = inputs.dtype

    # Tile selection: sublane-aligned M, lane-aligned N/K; caps keep the VMEM
    # footprint a few MiB regardless of layer size (safe on v5e/v6e/v7x).
    tm = _round_up(tm if tm is not None else min(_round_up(B, 8), 256), 8)
    tn = _round_up(tn if tn is not None else min(_round_up(N, 128), 256), 128)
    tk = _round_up(tk if tk is not None else min(_round_up(K, 128), 512), 128)

    Mp, Kp, Np = _round_up(B, tm), _round_up(K, tk), _round_up(N, tn)

    b2 = b.reshape(1, N)
    bm2 = b_mask.reshape(1, N)

    if premask:
        w_streams = (w * w_mask,)
        b_streams = (b2 * bm2,)
        kernel = _premasked_dense_kernel
    else:
        w_streams = (w, w_mask)
        b_streams = (b2, bm2)
        kernel = _masked_dense_kernel

    def pad2(a, rows, cols):
        pr, pc = rows - a.shape[0], cols - a.shape[1]
        if pr or pc:
            a = jnp.pad(a, ((0, pr), (0, pc)))
        return a

    x_p = pad2(inputs, Mp, Kp)
    w_p = tuple(pad2(a, Kp, Np) for a in w_streams)
    b_p = tuple(pad2(a, 1, Np) for a in b_streams)

    grid = (Mp // tm, Np // tn, Kp // tk)

    in_specs = (
        [pl.BlockSpec((tm, tk), lambda i, j, k: (i, k))]
        + [pl.BlockSpec((tk, tn), lambda i, j, k: (k, j)) for _ in w_p]
        + [pl.BlockSpec((1, tn), lambda i, j, k: (0, j)) for _ in b_p]
    )

    # Rough VMEM budget: double-buffered input tiles + double-buffered output
    # tile + f32 accumulator, with generous slack; clamp to sane bounds.
    itemsize = jnp.dtype(dtype).itemsize
    est = (2 * itemsize * (tm * tk + len(w_p) * tk * tn + len(b_p) * tn)
           + 2 * itemsize * tm * tn
           + 4 * tm * tn)
    vmem_limit = int(min(max(2 * est, 16 << 20), 96 << 20))

    out = pl.pallas_call(
        kernel,
        out_shape=jax.ShapeDtypeStruct((Mp, Np), dtype),
        grid_spec=pltpu.PrefetchScalarGridSpec(
            num_scalar_prefetch=0,
            grid=grid,
            in_specs=in_specs,
            out_specs=pl.BlockSpec((tm, tn), lambda i, j, k: (i, j)),
            scratch_shapes=[pltpu.VMEM((tm, tn), jnp.float32)],
        ),
        compiler_params=pltpu.CompilerParams(
            dimension_semantics=("parallel", "parallel", "arbitrary"),
            vmem_limit_bytes=vmem_limit,
        ),
    )(x_p, *w_p, *b_p)

    return out[:B, :N]


def init_masked_dense_params(key, in_features, out_features, dtype=jnp.float32):
    """Deterministic re-implementation of the module's __init__.

    kaiming_normal_(a=sqrt(5), mode='fan_in') on a (in_features, out_features)
    tensor: fan_in = out_features (torch uses tensor.size(1)),
    gain = sqrt(2 / (1 + a^2)) = sqrt(1/3), std = gain / sqrt(fan_in).
    """
    gain = math.sqrt(2.0 / (1.0 + 5.0))
    std = gain / math.sqrt(out_features)
    w = jax.random.normal(key, (in_features, out_features), dtype) * std
    w_mask = jnp.ones((in_features, out_features), dtype)
    b = jnp.zeros((out_features,), dtype)
    b_mask = jnp.ones((out_features,), dtype)
    return w, w_mask, b, b_mask
    # TODO(synk): prune() is host-side NumPy percentile bookkeeping on module
    # state, not part of the forward pass, so it is not implemented in Pallas.


if __name__ == "__main__":
    key = jax.random.PRNGKey(0)
    k_x, k_w, k_b, k_wm, k_bm, k_x2, k_w2, k_b2, k_wm2 = jax.random.split(key, 9)

    # ---- Test 1: module-like small shapes (single tile after padding) ----
    batch, in_f, out_f = 8, 32, 64
    x = jax.random.normal(k_x, (batch, in_f), jnp.float32)
    w, w_mask, b, b_mask = init_masked_dense_params(k_w, in_f, out_f)
    # Nonzero bias and non-trivial (pruned-like) masks to exercise both paths.
    b = jax.random.normal(k_b, (out_f,), jnp.float32) * 0.1
    w_mask = (jax.random.uniform(k_wm, w.shape) > 0.3).astype(jnp.float32)
    b_mask = (jax.random.uniform(k_bm, b.shape) > 0.3).astype(jnp.float32)

    ref = x @ (w * w_mask) + (b * b_mask)
    out = jax.block_until_ready(masked_dense(x, w, w_mask, b, b_mask))
    assert out.shape == ref.shape
    assert jnp.allclose(out, ref, atol=1e-4, rtol=1e-4), "mismatch (masked path)"

    out_pm = jax.block_until_ready(
        masked_dense(x, w, w_mask, b, b_mask, premask=True))
    assert jnp.allclose(out_pm, ref, atol=1e-4, rtol=1e-4), "mismatch (premask path)"

    # ---- Test 2: multi-tile grid (exercises accumulator + pl.when branches,
    #              padding on M and N, K reduction over several tiles) ----
    B2, K2, N2 = 160, 384, 320
    x2 = jax.random.normal(k_x2, (B2, K2), jnp.float32)
    w2, wm2, b2, bm2 = init_masked_dense_params(k_w2, K2, N2)
    b2 = jax.random.normal(k_b2, (N2,), jnp.float32) * 0.1
    wm2 = (jax.random.uniform(k_wm2, w2.shape) > 0.5).astype(jnp.float32)

    ref2 = x2 @ (w2 * wm2) + (b2 * bm2)
    out2 = jax.block_until_ready(
        masked_dense(x2, w2, wm2, b2, bm2, tm=64, tn=128, tk=128))
    assert out2.shape == ref2.shape
    assert jnp.allclose(out2, ref2, atol=1e-4, rtol=1e-4), "mismatch (tiled path)"

    print("KERNEL_OK")
</pallas_src>

<mosaic_0001>
module attributes {stable_mosaic.version = 11 : i64} {
  func.func @_masked_dense_kernel(%arg0: i32, %arg1: i32, %arg2: i32, %arg3: memref<8x128xf32, #tpu.memory_space<vmem>>, %arg4: memref<128x128xf32, #tpu.memory_space<vmem>>, %arg5: memref<128x128xf32, #tpu.memory_space<vmem>>, %arg6: memref<1x128xf32, #tpu.memory_space<vmem>>, %arg7: memref<1x128xf32, #tpu.memory_space<vmem>>, %arg8: memref<8x128xf32, #tpu.memory_space<vmem>>, %arg9: memref<8x128xf32, #tpu.memory_space<vmem>>) attributes {dimension_semantics = [#tpu.dimension_semantics<parallel>, #tpu.dimension_semantics<parallel>, #tpu.dimension_semantics<arbitrary>], iteration_bounds = array<i64: 1, 1, 1>, scalar_prefetch = 0 : i64, scratch_operands = 1 : i64, tpu.core_type = #tpu.core_type<tc>, window_params = [{transform_indices = @transform_0, window_bounds = array<i64: 8, 128>}, {transform_indices = @transform_1, window_bounds = array<i64: 128, 128>}, {transform_indices = @transform_2, window_bounds = array<i64: 128, 128>}, {transform_indices = @transform_3, window_bounds = array<i64: 1, 128>}, {transform_indices = @transform_4, window_bounds = array<i64: 1, 128>}, {transform_indices = @transform_5, window_bounds = array<i64: 8, 128>}]} {
    %c0_i32 = arith.constant 0 : i32
    %0 = arith.cmpi eq, %arg2, %c0_i32 : i32
    %1 = arith.extui %0 : i1 to i32
    %c0_i32_0 = arith.constant 0 : i32
    %2 = arith.cmpi ne, %1, %c0_i32_0 : i32
    scf.if %2 {
      %cst_12 = arith.constant 0.000000e+00 : f32
      %14 = vector.broadcast %cst_12 : f32 to vector<8x128xf32>
      %c0_13 = arith.constant 0 : index
      %c0_14 = arith.constant 0 : index
      %15 = vector.load %arg9[%c0_13, %c0_14] : memref<8x128xf32, #tpu.memory_space<vmem>>, vector<8x128xf32>
      tpu.vector_store %arg9[%c0_13, %c0_14], %14 {strides = array<i32>} : memref<8x128xf32, #tpu.memory_space<vmem>>, vector<8x128xf32>,
    } else {
    }
    %c0 = arith.constant 0 : index
    %c0_1 = arith.constant 0 : index
    %3 = vector.load %arg4[%c0, %c0_1] : memref<128x128xf32, #tpu.memory_space<vmem>>, vector<128x128xf32>
    %c0_2 = arith.constant 0 : index
    %c0_3 = arith.constant 0 : index
    %4 = vector.load %arg5[%c0_2, %c0_3] : memref<128x128xf32, #tpu.memory_space<vmem>>, vector<128x128xf32>
    %5 = arith.mulf %3, %4 : vector<128x128xf32>
    %c0_4 = arith.constant 0 : index
    %c0_5 = arith.constant 0 : index
    %6 = vector.load %arg9[%c0_4, %c0_5] : memref<8x128xf32, #tpu.memory_space<vmem>>, vector<8x128xf32>
    %c0_6 = arith.constant 0 : index
    %c0_7 = arith.constant 0 : index
    %7 = vector.load %arg3[%c0_6, %c0_7] : memref<8x128xf32, #tpu.memory_space<vmem>>, vector<8x128xf32>
    %cst = arith.constant dense<0.000000e+00> : vector<8x128xf32>
    %8 = tpu.matmul %7, %5, %cst {dimension_numbers = #tpu.dot_dimension_numbers<[1], [0], [0], [1], [0, 0, 1, 1], [], []>} : vector<8x128xf32>, vector<128x128xf32>, vector<8x128xf32> -> vector<8x128xf32>
    %9 = arith.addf %6, %8 : vector<8x128xf32>
    %c0_8 = arith.constant 0 : index
    %c0_9 = arith.constant 0 : index
    %10 = vector.load %arg9[%c0_8, %c0_9] : memref<8x128xf32, #tpu.memory_space<vmem>>, vector<8x128xf32>
    tpu.vector_store %arg9[%c0_8, %c0_9], %9 {strides = array<i32>} : memref<8x128xf32, #tpu.memory_space<vmem>>, vector<8x128xf32>,
    %c0_i32_10 = arith.constant 0 : i32
    %11 = arith.cmpi eq, %arg2, %c0_i32_10 : i32
    %12 = arith.extui %11 : i1 to i32
    %c0_i32_11 = arith.constant 0 : i32
    %13 = arith.cmpi ne, %12, %c0_i32_11 : i32
    scf.if %13 {
      %c0_12 = arith.constant 0 : index
      %c0_13 = arith.constant 0 : index
      %14 = vector.load %arg6[%c0_12, %c0_13] : memref<1x128xf32, #tpu.memory_space<vmem>>, vector<1x128xf32>
      %c0_14 = arith.constant 0 : index
      %c0_15 = arith.constant 0 : index
      %15 = vector.load %arg7[%c0_14, %c0_15] : memref<1x128xf32, #tpu.memory_space<vmem>>, vector<1x128xf32>
      %16 = arith.mulf %14, %15 : vector<1x128xf32>
      %c0_16 = arith.constant 0 : index
      %c0_17 = arith.constant 0 : index
      %17 = vector.load %arg9[%c0_16, %c0_17] : memref<8x128xf32, #tpu.memory_space<vmem>>, vector<8x128xf32>
      %18 = vector.broadcast %16 : vector<1x128xf32> to vector<8x128xf32>
      %19 = arith.addf %17, %18 : vector<8x128xf32>
      %c0_18 = arith.constant 0 : index
      %c0_19 = arith.constant 0 : index
      %20 = vector.load %arg8[%c0_18, %c0_19] : memref<8x128xf32, #tpu.memory_space<vmem>>, vector<8x128xf32>
      tpu.vector_store %arg8[%c0_18, %c0_19], %19 {strides = array<i32>} : memref<8x128xf32, #tpu.memory_space<vmem>>, vector<8x128xf32>,
    } else {
    }
    return
  }
  func.func @transform_0(%arg0: i32, %arg1: i32, %arg2: i32) -> (i32, i32) {
    %c0_i32 = arith.constant 0 : i32
    return %arg0, %arg2 : i32, i32
  }
  func.func @transform_1(%arg0: i32, %arg1: i32, %arg2: i32) -> (i32, i32) {
    %c0_i32 = arith.constant 0 : i32
    return %arg2, %arg1 : i32, i32
  }
  func.func @transform_2(%arg0: i32, %arg1: i32, %arg2: i32) -> (i32, i32) {
    %c0_i32 = arith.constant 0 : i32
    return %arg2, %arg1 : i32, i32
  }
  func.func @transform_3(%arg0: i32, %arg1: i32, %arg2: i32) -> (i32, i32) {
    %c0_i32 = arith.constant 0 : i32
    %c0_i32_0 = arith.constant 0 : i32
    return %c0_i32, %arg1 : i32, i32
  }
  func.func @transform_4(%arg0: i32, %arg1: i32, %arg2: i32) -> (i32, i32) {
    %c0_i32 = arith.constant 0 : i32
    %c0_i32_0 = arith.constant 0 : i32
    return %c0_i32, %arg1 : i32, i32
  }
  func.func @transform_5(%arg0: i32, %arg1: i32, %arg2: i32) -> (i32, i32) {
    %c0_i32 = arith.constant 0 : i32
    return %arg0, %arg1 : i32, i32
  }
}

</mosaic_0001>

<llo_original>
// kernel: tpu_custom_call.1
$region0: #{tpu_custom_call.1}
  #allocation0 [shape = 'u32[]', space=smem, size = 0x4, offset = 0x4, fixed_abs, tag = 'smem constant byte address 0x4 - core index']
  #allocation1 [shape = 'u32[144,128]{1,0:T(1,128)}', space=vmem, size = 0x12000, scoped, tag = 'internal scratch']
  #allocation2 [shape = 'f32[8,128]{1,0:T(8,128)}', space=vmem, size = 0x1000, scoped, tag = 'scratch operand']
  %s0 = inlined_call_operand.hbm [shape: f32[8,128], index: 0, kind: input, shape index: {}]
  %s1 = inlined_call_operand.hbm [shape: f32[128,128], index: 1, kind: input, shape index: {}]
  %s2 = inlined_call_operand.hbm [shape: f32[128,128], index: 2, kind: input, shape index: {}]
  %s3 = inlined_call_operand.vmem [shape: f32[1,128], index: 3, kind: input, shape index: {}]
  %s4 = inlined_call_operand.vmem [shape: f32[1,128], index: 4, kind: input, shape index: {}]
  %s5 = inlined_call_operand.hbm [shape: f32[8,128], index: 5, kind: output, shape index: {}]
  %s6 = sld [smem:[#allocation0]]
  $region50: #{tpu_custom_call.1} parent=0
    _
  %s8 = ssub.s32 1, %s6
  %s9 = scalar_select 0, %s8, %s6
  $region1: #{tpu_custom_call.1} parent=0
    #allocation3 [shape = 'u8[4096]{0}', space=vmem, size = 0x1000, scoped, tag = 'input window, operand 0, single buffered']
    #allocation4 [shape = 's32[1]{0}', space=sflag, size = 0x4, scoped, tag = 'scoped memory for tpu_custom_call.1']
    #allocation5 [shape = 's32[1]{0}', space=sflag, size = 0x4, scoped, tag = 'scoped memory for tpu_custom_call.1']
    #allocation6 [shape = 'u8[65536]{0}', space=vmem, size = 0x10000, scoped, tag = 'input window, operand 1, single buffered']
    #allocation7 [shape = 's32[1]{0}', space=sflag, size = 0x4, scoped, tag = 'scoped memory for tpu_custom_call.1']
    #allocation8 [shape = 'u8[65536]{0}', space=vmem, size = 0x10000, scoped, tag = 'input window, operand 2, single buffered']
    #allocation9 [shape = 'u8[4096]{0}', space=vmem, size = 0x1000, scoped, tag = 'output window, operand 0, single buffered']
    %10 = vsyncpa [#allocation4], 0
    %11 = vsyncpa [#allocation7], 0
    %12 = vsyncpa [#allocation5], 0
    // Predicated region
    $region2: #{tpu_custom_call.1} parent=1 // pred_check
      _
    $region3: #{tpu_custom_call.1} parent=1 // pred_check_branch
      %14 = sbr.rel (0) target = $region5
    $region4: #{tpu_custom_call.1} parent=1 // pred_region
      %s16 = ssub.s32 128, 128
      %17 = vsyncadd [#allocation4], %s16
      %s19 = sshll.u32 [#allocation3], 4
      %s20 = int_to_ptr.vmem [resolvable:$true] %s19
      %22 = dma.hbm_to_vmem [thread:$0]  %s0, 128, %s20, [#allocation4]
    $region5: #{tpu_custom_call.1} parent=1 // pred_fallthru
      _
    // Predicated region
    $region6: #{tpu_custom_call.1} parent=1 // pred_check
      _
    $region7: #{tpu_custom_call.1} parent=1 // pred_check_branch
      %24 = sbr.rel (0) target = $region9
    $region8: #{tpu_custom_call.1} parent=1 // pred_region
      %s26 = ssub.s32 2048, 2048
      %27 = vsyncadd [#allocation7], %s26
      %s28 = sshll.u32 [#allocation6], 4
      %s29 = int_to_ptr.vmem [resolvable:$true] %s28
      %34 = dma.hbm_to_vmem [thread:$0]  %s1, 2048, %s29, [#allocation7], 128, 128, 8
    $region9: #{tpu_custom_call.1} parent=1 // pred_fallthru
      _
    // Predicated region
    $region10: #{tpu_custom_call.1} parent=1 // pred_check
      _
    $region11: #{tpu_custom_call.1} parent=1 // pred_check_branch
      %36 = sbr.rel (0) target = $region13
    $region12: #{tpu_custom_call.1} parent=1 // pred_region
      %s38 = ssub.s32 2048, 2048
      %39 = vsyncadd [#allocation7], %s38
      %s40 = sshll.u32 [#allocation8], 4
      %s41 = int_to_ptr.vmem [resolvable:$true] %s40
      %46 = dma.hbm_to_vmem [thread:$0]  %s2, 2048, %s41, [#allocation7], 128, 128, 8
    $region13: #{tpu_custom_call.1} parent=1 // pred_fallthru
      _
    // Predicated region
    $region14: #{tpu_custom_call.1} parent=1 // pred_check
      _
    $region15: #{tpu_custom_call.1} parent=1 // pred_check_branch
      %48 = sbr.rel (0) target = $region17
    $region16: #{tpu_custom_call.1} parent=1 // pred_region
      _
    $region17: #{tpu_custom_call.1} parent=1 // pred_fallthru
      _
    // Predicated region
    $region18: #{tpu_custom_call.1} parent=1 // pred_check
      _
    $region19: #{tpu_custom_call.1} parent=1 // pred_check_branch
      %50 = sbr.rel (0) target = $region21
    $region20: #{tpu_custom_call.1} parent=1 // pred_region
      _
    $region21: #{tpu_custom_call.1} parent=1 // pred_fallthru
      _
    // Predicated region
    $region22: #{tpu_custom_call.1} parent=1 // pred_check
      _
    $region23: #{tpu_custom_call.1} parent=1 // pred_check_branch
      %52 = sbr.rel (0) target = $region25
    $region24: #{tpu_custom_call.1} parent=1 // pred_region
      %53 = dma.done [#allocation4], 128
    $region25: #{tpu_custom_call.1} parent=1 // pred_fallthru
      _
    // Predicated region
    $region26: #{tpu_custom_call.1} parent=1 // pred_check
      _
    $region27: #{tpu_custom_call.1} parent=1 // pred_check_branch
      %55 = sbr.rel (0) target = $region29
    $region28: #{tpu_custom_call.1} parent=1 // pred_region
      %56 = dma.done [#allocation7], 2048
    $region29: #{tpu_custom_call.1} parent=1 // pred_fallthru
      _
    // Predicated region
    $region30: #{tpu_custom_call.1} parent=1 // pred_check
      _
    $region31: #{tpu_custom_call.1} parent=1 // pred_check_branch
      %58 = sbr.rel (0) target = $region33
    $region32: #{tpu_custom_call.1} parent=1 // pred_region
      %59 = dma.done [#allocation7], 2048
    $region33: #{tpu_custom_call.1} parent=1 // pred_fallthru
      _
    %p60 = scmp.eq.s32.totalorder 0, 0
    // Predicated region
    $region34: #{tpu_custom_call.1} parent=1 // pred_check
      %p61 = pneg %p60
    $region35: #{tpu_custom_call.1} parent=1 // pred_check_branch
      %63 = sbr.rel (%p61) target = $region37
    $region36: #{tpu_custom_call.1} parent=1 // pred_region
      %64 = vst [vmem:[#allocation2] sm:$0xff] 0.0
    $region37: #{tpu_custom_call.1} parent=1 // pred_fallthru
      _
    %v65 = vld [vmem:[#allocation6] sm:$0xff]
    %v66 = vld [vmem:[#allocation6 + $0x8] sm:$0xff]
    %v67 = vld [vmem:[#allocation6 + $0x10] sm:$0xff]
    %v68 = vld [vmem:[#allocation6 + $0x18] sm:$0xff]
    %v69 = vld [vmem:[#allocation6 + $0x20] sm:$0xff]
    %v70 = vld [vmem:[#allocation6 + $0x28] sm:$0xff]
    %v71 = vld [vmem:[#allocation6 + $0x30] sm:$0xff]
    %v72 = vld [vmem:[#allocation6 + $0x38] sm:$0xff]
    %v73 = vld [vmem:[#allocation6 + $0x40] sm:$0xff]
    %v74 = vld [vmem:[#allocation6 + $0x48] sm:$0xff]
    %v75 = vld [vmem:[#allocation6 + $0x50] sm:$0xff]
    %v76 = vld [vmem:[#allocation6 + $0x58] sm:$0xff]
    %v77 = vld [vmem:[#allocation6 + $0x60] sm:$0xff]
    %v78 = vld [vmem:[#allocation6 + $0x68] sm:$0xff]
    %v79 = vld [vmem:[#allocation6 + $0x70] sm:$0xff]
    %v80 = vld [vmem:[#allocation6 + $0x78] sm:$0xff]
    %v81 = vld [vmem:[#allocation8] sm:$0xff]
    %v82 = vld [vmem:[#allocation8 + $0x8] sm:$0xff]
    %v83 = vld [vmem:[#allocation8 + $0x10] sm:$0xff]
    %v84 = vld [vmem:[#allocation8 + $0x18] sm:$0xff]
    %v85 = vld [vmem:[#allocation8 + $0x20] sm:$0xff]
    %v86 = vld [vmem:[#allocation8 + $0x28] sm:$0xff]
    %v87 = vld [vmem:[#allocation8 + $0x30] sm:$0xff]
    %v88 = vld [vmem:[#allocation8 + $0x38] sm:$0xff]
    %v89 = vld [vmem:[#allocation8 + $0x40] sm:$0xff]
    %v90 = vld [vmem:[#allocation8 + $0x48] sm:$0xff]
    %v91 = vld [vmem:[#allocation8 + $0x50] sm:$0xff]
    %v92 = vld [vmem:[#allocation8 + $0x58] sm:$0xff]
    %v93 = vld [vmem:[#allocation8 + $0x60] sm:$0xff]
    %v94 = vld [vmem:[#allocation8 + $0x68] sm:$0xff]
    %v95 = vld [vmem:[#allocation8 + $0x70] sm:$0xff]
    %v96 = vld [vmem:[#allocation8 + $0x78] sm:$0xff]
    %v97 = vmul.f32 %v65, %v81
    %v98 = vmul.f32 %v66, %v82
    %v99 = vmul.f32 %v67, %v83
    %v100 = vmul.f32 %v68, %v84
    %v101 = vmul.f32 %v69, %v85
    %v102 = vmul.f32 %v70, %v86
    %v103 = vmul.f32 %v71, %v87
    %v104 = vmul.f32 %v72, %v88
    %v105 = vmul.f32 %v73, %v89
    %v106 = vmul.f32 %v74, %v90
    %v107 = vmul.f32 %v75, %v91
    %v108 = vmul.f32 %v76, %v92
    %v109 = vmul.f32 %v77, %v93
    %v110 = vmul.f32 %v78, %v94
    %v111 = vmul.f32 %v79, %v95
    %v112 = vmul.f32 %v80, %v96
    %v113 = vld [vmem:[#allocation2] sm:$0xff]
    %v114 = vld [vmem:[#allocation3] sm:$0xff]
    %115 = vmatprep.subr.mxu0 0.0
    %116 = vmatpush1.msra.mxu0 %v112
    %117 = vmatprep.subr.mxu0 0.0
    %118 = vmatpush1.msra.mxu0 %v111
    %119 = vmatprep.subr.mxu0 0.0
    %120 = vmatpush1.msra.mxu0 %v110
    %121 = vmatprep.subr.mxu0 0.0
    %122 = vmatpush1.msra.mxu0 %v109
    %123 = vmatprep.subr.mxu0 0.0
    %124 = vmatpush1.msra.mxu0 %v108
    %125 = vmatprep.subr.mxu0 0.0
    %126 = vmatpush1.msra.mxu0 %v107
    %127 = vmatprep.subr.mxu0 0.0
    %128 = vmatpush1.msra.mxu0 %v106
    %129 = vmatprep.subr.mxu0 0.0
    %130 = vmatpush1.msra.mxu0 %v105
    %131 = vmatprep.subr.mxu0 0.0
    %132 = vmatpush1.msra.mxu0 %v104
    %133 = vmatprep.subr.mxu0 0.0
    %134 = vmatpush1.msra.mxu0 %v103
    %135 = vmatprep.subr.mxu0 0.0
    %136 = vmatpush1.msra.mxu0 %v102
    %137 = vmatprep.subr.mxu0 0.0
    %138 = vmatpush1.msra.mxu0 %v101
    %139 = vmatprep.subr.mxu0 0.0
    %140 = vmatpush1.msra.mxu0 %v100
    %141 = vmatprep.subr.mxu0 0.0
    %142 = vmatpush1.msra.mxu0 %v99
    %143 = vmatprep.subr.mxu0 0.0
    %144 = vmatpush1.msra.mxu0 %v98
    %145 = vmatprep.subr.mxu0 0.0
    %146 = vmatpush1.msra.mxu0 %v97
    %147 = vmatprep.subr.mxu0 0.0
    %148 = vmatpush2.msra.mxu0 0.0
    %149 = vmatprep.subr.mxu0 0.0
    %150 = vmatpush2.msra.mxu0 0.0
    %151 = vmatprep.subr.mxu0 0.0
    %152 = vmatpush2.msra.mxu0 0.0
    %153 = vmatprep.subr.mxu0 0.0
    %154 = vmatpush2.msra.mxu0 0.0
    %155 = vmatprep.subr.mxu0 0.0
    %156 = vmatpush2.msra.mxu0 0.0
    %157 = vmatprep.subr.mxu0 0.0
    %158 = vmatpush2.msra.mxu0 0.0
    %159 = vmatprep.subr.mxu0 0.0
    %160 = vmatpush2.msra.mxu0 0.0
    %161 = vmatprep.subr.mxu0 0.0
    %162 = vmatpush2.msra.mxu0 0.0
    %163 = vmatprep.subr.mxu0 0.0
    %164 = vmatpush2.msra.mxu0 0.0
    %165 = vmatprep.subr.mxu0 0.0
    %166 = vmatpush2.msra.mxu0 0.0
    %167 = vmatprep.subr.mxu0 0.0
    %168 = vmatpush2.msra.mxu0 0.0
    %169 = vmatprep.subr.mxu0 0.0
    %170 = vmatpush2.msra.mxu0 0.0
    %171 = vmatprep.subr.mxu0 0.0
    %172 = vmatpush2.msra.mxu0 0.0
    %173 = vmatprep.subr.mxu0 0.0
    %174 = vmatpush2.msra.mxu0 0.0
    %175 = vmatprep.subr.mxu0 0.0
    %176 = vmatpush2.msra.mxu0 0.0
    %177 = vmatprep.subr.mxu0 0.0
    %178 = vmatpush2.msra.mxu0 0.0
    %179 = vmatprep.mubr.f32.mxu0 0.0
    %180 = vmatmul.mubr.f32.gmra.mxu0 %v114
    %v181 = vpop.f32.mrf.mxu0
    %v182 = vadd.f32 0.0, %v181
    %v183 = vpop.f32.mrf.mxu0
    %184 = vdwg.mxu0
    %v185 = vadd.f32 %v113, %v182
    %186 = vst [vmem:[#allocation2] sm:$0xff] %v185
    // Predicated region
    $region38: #{tpu_custom_call.1} parent=1 // pred_check
      %p187 = pneg %p60
    $region39: #{tpu_custom_call.1} parent=1 // pred_check_branch
      %189 = sbr.rel (%p187) target = $region41
    $region40: #{tpu_custom_call.1} parent=1 // pred_region
      %v190 = vld [vmem:[%s3] sm:$0x1]
      %v191 = vld [vmem:[%s4] sm:$0x1]
      %v192 = vmul.f32 %v190, %v191
      %v193 = vld [vmem:[#allocation2] sm:$0xff]
      %v195 = vlaneseq
      %v196 = vshrl.u32 %v195, 7
      %v197 = vsub.s32 0, %v196
      %v198 = vrot.slane %v192, %v197
      %v200 = vadd.f32 %v193, %v198
      %201 = vst [vmem:[#allocation9] sm:$0xff] %v200
    $region41: #{tpu_custom_call.1} parent=1 // pred_fallthru
      _
    // Predicated region
    $region42: #{tpu_custom_call.1} parent=1 // pred_check
      _
    $region43: #{tpu_custom_call.1} parent=1 // pred_check_branch
      %203 = sbr.rel (0) target = $region45
    $region44: #{tpu_custom_call.1} parent=1 // pred_region
      %s205 = ssub.s32 128, 128
      %206 = vsyncadd [#allocation5], %s205
      %s208 = sshll.u32 [#allocation9], 4
      %s209 = int_to_ptr.vmem [resolvable:$true] %s208
      %211 = dma.vmem_to_hbm [thread:$0]  %s209, 128, %s5, [#allocation5]
    $region45: #{tpu_custom_call.1} parent=1 // pred_fallthru
      _
    // Predicated region
    $region46: #{tpu_custom_call.1} parent=1 // pred_check
      _
    $region47: #{tpu_custom_call.1} parent=1 // pred_check_branch
      %213 = sbr.rel (0) target = $region49
    $region48: #{tpu_custom_call.1} parent=1 // pred_region
      %214 = dma.done [#allocation5], 128
    $region49: #{tpu_custom_call.1} parent=1 // pred_fallthru
      _
    %215 = vsyncpa [#allocation4], 1
    %216 = vsyncpa [#allocation7], 1
    %217 = vsyncpa [#allocation5], 1

</llo_original>
